<compile_context>
chip_gen: v5e
topology: v5e:2x2
jax: 0.10.0
libtpu: 0.0.40
codegen_flags: <defaults>
</compile_context>

<pallas_src>
import jax
import jax.numpy as jnp
from jax import lax
from jax.experimental import pallas as pl
from jax.experimental.pallas import tpu as pltpu


def _round_up(x, m):
    return ((x + m - 1) // m) * m


def lfe_kernel(alpha_ref, p_ref, w1_ref, b1_ref, w2_ref, b2_ref, out_ref):
    """One M-tile of fused conv9x9+PReLU -> conv1x1+PReLU.

    p_ref   : (TM, 2*K1p) bf16  - two pixels' im2col patches packed per row.
    w1_ref  : (2*K1p, 128) bf16 - block-diagonal [[w1, 0], [0, w1]].
    w2_ref  : (128, 128)   bf16 - block-diagonal [[w2, 0], [0, w2]].
    b1_ref/b2_ref : (1, 128) f32 - biases duplicated for both pixel halves.
    out_ref : (TM, 128) f32     - lane-dense output (two pixels per row).
    alpha_ref : (2,) f32 in SMEM - [a1, a2] shared PReLU parameters.
    """
    a1 = alpha_ref[0]
    a2 = alpha_ref[1]

    # conv1 (9x9) as im2col matmul on the MXU, f32 accumulation.
    h = jnp.dot(p_ref[...], w1_ref[...], preferred_element_type=jnp.float32)
    h = h + b1_ref[...]
    h = jnp.where(h >= 0, h, a1 * h)                    # PReLU (shared scalar)

    # conv2 (1x1) as matmul + bias + PReLU (bf16 MXU, f32 accumulate/epilogue).
    y = jnp.dot(h.astype(jnp.bfloat16), w2_ref[...],
                preferred_element_type=jnp.float32)
    y = y + b2_ref[...]
    y = jnp.where(y >= 0, y, a2 * y)

    out_ref[...] = y.astype(out_ref.dtype)


def _im2col_nhwc(x_nhwc, kh, kw, padding):
    """Extract (kh, kw) zero-padded patches. Returns (N*H*W, kh*kw*C)."""
    N, H, W, C = x_nhwc.shape
    xp = jnp.pad(x_nhwc, ((0, 0), (padding, padding), (padding, padding), (0, 0)))
    cols = []
    for dy in range(kh):
        for dx in range(kw):
            cols.append(xp[:, dy:dy + H, dx:dx + W, :])
    patches = jnp.concatenate(cols, axis=-1)            # (N, H, W, kh*kw*C)
    return patches.reshape(N * H * W, kh * kw * C)


def lfe_forward(x_nchw, params, tm_wide=512):
    """x_nchw: (N, C_in, H, W) float32. Returns (N, 64, H, W) float32."""
    w1, b1, a1, w2, b2, a2 = (params["w1"], params["b1"], params["a1"],
                              params["w2"], params["b2"], params["a2"])
    N, C_in, H, W = x_nchw.shape
    out_c = w1.shape[0]
    kh, kw = w1.shape[2], w1.shape[3]
    padding = (kh - 1) // 2                              # get_valid_padding(9,1)=4

    # --- glue (plain JAX): NCHW -> NHWC, bf16, im2col ------------------------
    # TODO(synk): drop the NCHW<->NHWC transposes if the surrounding model can
    # consume NHWC; each one is a full extra HBM pass.
    x_nhwc = jnp.transpose(x_nchw, (0, 2, 3, 1)).astype(jnp.bfloat16)
    patches = _im2col_nhwc(x_nhwc, kh, kw, padding)      # (M, K1) bf16
    M, K1 = patches.shape
    K1p = _round_up(K1, 128)                             # 243 -> 256
    Kw = 2 * K1p                                         # two pixels per row
    OCw = 2 * out_c                                      # 128-lane output width

    # Pack two consecutive pixels per row -> lane-dense 128-wide output.
    Mw = (M + 1) // 2
    tm = min(tm_wide, _round_up(Mw, 16))                 # rows per grid step
    Mw_pad = _round_up(Mw, tm)
    M_pad = 2 * Mw_pad

    patches = jnp.pad(patches, ((0, M_pad - M), (0, K1p - K1)))
    patches_wide = patches.reshape(Mw_pad, Kw)           # contiguous reshape

    # Weights: (O, I, kh, kw) -> (kh*kw*I, O) matching (dy, dx, c) patch order,
    # zero-padded to K1p and duplicated block-diagonally for the wide packing.
    w1_mat = jnp.transpose(w1, (2, 3, 1, 0)).reshape(K1, out_c)
    w1_mat = jnp.pad(w1_mat, ((0, K1p - K1), (0, 0)))
    w1_wide = jnp.zeros((Kw, OCw), jnp.float32)
    w1_wide = w1_wide.at[:K1p, :out_c].set(w1_mat)
    w1_wide = w1_wide.at[K1p:, out_c:].set(w1_mat)
    w1_wide = w1_wide.astype(jnp.bfloat16)

    w2_mat = jnp.transpose(w2, (2, 3, 1, 0)).reshape(out_c, out_c)
    w2_wide = jnp.zeros((OCw, OCw), jnp.float32)
    w2_wide = w2_wide.at[:out_c, :out_c].set(w2_mat)
    w2_wide = w2_wide.at[out_c:, out_c:].set(w2_mat)
    w2_wide = w2_wide.astype(jnp.bfloat16)

    b1_wide = jnp.concatenate([b1, b1]).reshape(1, OCw).astype(jnp.float32)
    b2_wide = jnp.concatenate([b2, b2]).reshape(1, OCw).astype(jnp.float32)
    alphas = jnp.stack([jnp.asarray(a1, jnp.float32),
                        jnp.asarray(a2, jnp.float32)])

    grid = (Mw_pad // tm,)
    flops = 2 * Mw_pad * (Kw * OCw + OCw * OCw)
    bytes_accessed = (Mw_pad * Kw * 2              # bf16 patches
                      + Mw_pad * OCw * 4           # f32 output
                      + (Kw * OCw + OCw * OCw) * 2 # bf16 weights
                      + 2 * OCw * 4)               # biases

    out_wide = pl.pallas_call(
        lfe_kernel,
        out_shape=jax.ShapeDtypeStruct((Mw_pad, OCw), jnp.float32),
        grid_spec=pltpu.PrefetchScalarGridSpec(
            num_scalar_prefetch=0,
            grid=grid,
            in_specs=[
                pl.BlockSpec(memory_space=pltpu.MemorySpace.SMEM),  # alphas
                pl.BlockSpec((tm, Kw), lambda i: (i, 0)),           # patches (tiled)
                pl.BlockSpec((Kw, OCw), lambda i: (0, 0)),          # w1 (resident)
                pl.BlockSpec((1, OCw), lambda i: (0, 0)),           # b1 (resident)
                pl.BlockSpec((OCw, OCw), lambda i: (0, 0)),         # w2 (resident)
                pl.BlockSpec((1, OCw), lambda i: (0, 0)),           # b2 (resident)
            ],
            out_specs=pl.BlockSpec((tm, OCw), lambda i: (i, 0)),
        ),
        compiler_params=pltpu.CompilerParams(
            dimension_semantics=("parallel",),
            vmem_limit_bytes=32 * 1024 * 1024),
        cost_estimate=pl.CostEstimate(flops=flops, transcendentals=0,
                                      bytes_accessed=bytes_accessed),
    )(alphas, patches_wide, w1_wide, b1_wide, w2_wide, b2_wide)

    # (Mw_pad, 128) -> (M_pad, 64) is a pure contiguous reshape (pixel order).
    out_flat = out_wide.reshape(M_pad, out_c)[:M]
    out_nhwc = out_flat.reshape(N, H, W, out_c)
    return jnp.transpose(out_nhwc, (0, 3, 1, 2))         # back to NCHW


def ref_forward(x_nchw, params):
    """Pure-JAX f32 reference (mirrors the PyTorch module exactly)."""
    w1, b1, a1, w2, b2, a2 = (params["w1"], params["b1"], params["a1"],
                              params["w2"], params["b2"], params["a2"])
    y = lax.conv_general_dilated(x_nchw, w1, (1, 1), [(4, 4), (4, 4)],
                                 dimension_numbers=("NCHW", "OIHW", "NCHW"))
    y = y + b1[None, :, None, None]
    y = jnp.where(y >= 0, y, a1 * y)
    y2 = lax.conv_general_dilated(y, w2, (1, 1), [(0, 0), (0, 0)],
                                  dimension_numbers=("NCHW", "OIHW", "NCHW"))
    y2 = y2 + b2[None, :, None, None]
    y2 = jnp.where(y2 >= 0, y2, a2 * y2)
    return y2


def init_params(key, in_c=3, out_c=64):
    k1, k2, k3, k4 = jax.random.split(key, 4)
    w1 = jax.random.normal(k1, (out_c, in_c, 9, 9), jnp.float32) * 0.05
    b1 = jax.random.normal(k2, (out_c,), jnp.float32) * 0.05
    w2 = jax.random.normal(k3, (out_c, out_c, 1, 1), jnp.float32) * 0.05
    b2 = jax.random.normal(k4, (out_c,), jnp.float32) * 0.05
    # nn.PReLU() default: single shared parameter initialized to 0.25
    a1 = jnp.float32(0.25)
    a2 = jnp.float32(0.25)
    return {"w1": w1, "b1": b1, "a1": a1, "w2": w2, "b2": b2, "a2": a2}


if __name__ == "__main__":
    key = jax.random.PRNGKey(0)
    kx, kp = jax.random.split(key)

    N, C_in, H, W = 2, 3, 16, 16
    x = jax.random.normal(kx, (N, C_in, H, W), jnp.float32)
    params = init_params(kp, in_c=C_in, out_c=64)

    out = jax.jit(lfe_forward)(x, params)
    out = jax.block_until_ready(out)

    ref = ref_forward(x, params)
    assert out.shape == (N, 64, H, W)
    # bf16 matmul inputs (f32 accumulation) -> loosened tolerance vs f32 ref.
    max_err = float(jnp.max(jnp.abs(out - ref)))
    assert max_err < 5e-2, f"mismatch vs reference, max_err={max_err}"

    print("KERNEL_OK")
</pallas_src>

<mosaic_0001>
module attributes {stable_mosaic.version = 11 : i64} {
  func.func @lfe_kernel(%arg0: i32, %arg1: memref<2xf32, #tpu.memory_space<smem>>, %arg2: memref<256x512xbf16, #tpu.memory_space<vmem>>, %arg3: memref<512x128xbf16, #tpu.memory_space<vmem>>, %arg4: memref<1x128xf32, #tpu.memory_space<vmem>>, %arg5: memref<128x128xbf16, #tpu.memory_space<vmem>>, %arg6: memref<1x128xf32, #tpu.memory_space<vmem>>, %arg7: memref<256x128xf32, #tpu.memory_space<vmem>>) attributes {dimension_semantics = [#tpu.dimension_semantics<parallel>], iteration_bounds = array<i64: 1>, scalar_prefetch = 0 : i64, scratch_operands = 0 : i64, tpu.core_type = #tpu.core_type<tc>, window_params = [{transform_indices = @transform_0, window_bounds = array<i64: 2>}, {transform_indices = @transform_1, window_bounds = array<i64: 256, 512>}, {pipeline_mode = #tpu.pipeline_mode<synchronous>, transform_indices = @transform_2, window_bounds = array<i64: 512, 128>}, {pipeline_mode = #tpu.pipeline_mode<synchronous>, transform_indices = @transform_3, window_bounds = array<i64: 1, 128>}, {pipeline_mode = #tpu.pipeline_mode<synchronous>, transform_indices = @transform_4, window_bounds = array<i64: 128, 128>}, {pipeline_mode = #tpu.pipeline_mode<synchronous>, transform_indices = @transform_5, window_bounds = array<i64: 1, 128>}, {transform_indices = @transform_6, window_bounds = array<i64: 256, 128>}]} {
    %c0 = arith.constant 0 : index
    %0 = memref.load %arg1[%c0] : memref<2xf32, #tpu.memory_space<smem>>
    %c1 = arith.constant 1 : index
    %1 = memref.load %arg1[%c1] : memref<2xf32, #tpu.memory_space<smem>>
    %c0_0 = arith.constant 0 : index
    %c0_1 = arith.constant 0 : index
    %2 = vector.load %arg2[%c0_0, %c0_1] : memref<256x512xbf16, #tpu.memory_space<vmem>>, vector<256x512xbf16>
    %c0_2 = arith.constant 0 : index
    %c0_3 = arith.constant 0 : index
    %3 = vector.load %arg3[%c0_2, %c0_3] : memref<512x128xbf16, #tpu.memory_space<vmem>>, vector<512x128xbf16>
    %cst = arith.constant dense<0.000000e+00> : vector<256x128xf32>
    %4 = tpu.matmul %2, %3, %cst {dimension_numbers = #tpu.dot_dimension_numbers<[1], [0], [0], [1], [0, 0, 1, 1], [], []>} : vector<256x512xbf16>, vector<512x128xbf16>, vector<256x128xf32> -> vector<256x128xf32>
    %c0_4 = arith.constant 0 : index
    %c0_5 = arith.constant 0 : index
    %5 = vector.load %arg4[%c0_4, %c0_5] : memref<1x128xf32, #tpu.memory_space<vmem>>, vector<1x128xf32>
    %6 = vector.broadcast %5 : vector<1x128xf32> to vector<256x128xf32>
    %7 = arith.addf %4, %6 : vector<256x128xf32>
    %cst_6 = arith.constant 0.000000e+00 : f32
    %8 = vector.broadcast %cst_6 : f32 to vector<256x128xf32>
    %9 = arith.cmpf oge, %7, %8 : vector<256x128xf32>
    %10 = vector.broadcast %0 : f32 to vector<256x128xf32>
    %11 = arith.mulf %10, %7 : vector<256x128xf32>
    %12 = arith.select %9, %7, %11 : vector<256x128xi1>, vector<256x128xf32>
    %13 = arith.truncf %12 : vector<256x128xf32> to vector<256x128xbf16>
    %c0_7 = arith.constant 0 : index
    %c0_8 = arith.constant 0 : index
    %14 = vector.load %arg5[%c0_7, %c0_8] : memref<128x128xbf16, #tpu.memory_space<vmem>>, vector<128x128xbf16>
    %cst_9 = arith.constant dense<0.000000e+00> : vector<256x128xf32>
    %15 = tpu.matmul %13, %14, %cst_9 {dimension_numbers = #tpu.dot_dimension_numbers<[1], [0], [0], [1], [0, 0, 1, 1], [], []>} : vector<256x128xbf16>, vector<128x128xbf16>, vector<256x128xf32> -> vector<256x128xf32>
    %c0_10 = arith.constant 0 : index
    %c0_11 = arith.constant 0 : index
    %16 = vector.load %arg6[%c0_10, %c0_11] : memref<1x128xf32, #tpu.memory_space<vmem>>, vector<1x128xf32>
    %17 = vector.broadcast %16 : vector<1x128xf32> to vector<256x128xf32>
    %18 = arith.addf %15, %17 : vector<256x128xf32>
    %cst_12 = arith.constant 0.000000e+00 : f32
    %19 = vector.broadcast %cst_12 : f32 to vector<256x128xf32>
    %20 = arith.cmpf oge, %18, %19 : vector<256x128xf32>
    %21 = vector.broadcast %1 : f32 to vector<256x128xf32>
    %22 = arith.mulf %21, %18 : vector<256x128xf32>
    %23 = arith.select %20, %18, %22 : vector<256x128xi1>, vector<256x128xf32>
    %c0_13 = arith.constant 0 : index
    %c0_14 = arith.constant 0 : index
    %24 = vector.load %arg7[%c0_13, %c0_14] : memref<256x128xf32, #tpu.memory_space<vmem>>, vector<256x128xf32>
    tpu.vector_store %arg7[%c0_13, %c0_14], %23 {strides = array<i32>} : memref<256x128xf32, #tpu.memory_space<vmem>>, vector<256x128xf32>,
    return
  }
  func.func @transform_0(%arg0: i32) -> i32 {
    %c0_i32 = arith.constant 0 : i32
    %c0_i32_0 = arith.constant 0 : i32
    return %c0_i32 : i32
  }
  func.func @transform_1(%arg0: i32) -> (i32, i32) {
    %c0_i32 = arith.constant 0 : i32
    %c0_i32_0 = arith.constant 0 : i32
    return %arg0, %c0_i32 : i32, i32
  }
  func.func @transform_2(%arg0: i32) -> (i32, i32) {
    %c0_i32 = arith.constant 0 : i32
    %c0_i32_0 = arith.constant 0 : i32
    %c0_i32_1 = arith.constant 0 : i32
    return %c0_i32, %c0_i32_0 : i32, i32
  }
  func.func @transform_3(%arg0: i32) -> (i32, i32) {
    %c0_i32 = arith.constant 0 : i32
    %c0_i32_0 = arith.constant 0 : i32
    %c0_i32_1 = arith.constant 0 : i32
    return %c0_i32, %c0_i32_0 : i32, i32
  }
  func.func @transform_4(%arg0: i32) -> (i32, i32) {
    %c0_i32 = arith.constant 0 : i32
    %c0_i32_0 = arith.constant 0 : i32
    %c0_i32_1 = arith.constant 0 : i32
    return %c0_i32, %c0_i32_0 : i32, i32
  }
  func.func @transform_5(%arg0: i32) -> (i32, i32) {
    %c0_i32 = arith.constant 0 : i32
    %c0_i32_0 = arith.constant 0 : i32
    %c0_i32_1 = arith.constant 0 : i32
    return %c0_i32, %c0_i32_0 : i32, i32
  }
  func.func @transform_6(%arg0: i32) -> (i32, i32) {
    %c0_i32 = arith.constant 0 : i32
    %c0_i32_0 = arith.constant 0 : i32
    return %arg0, %c0_i32 : i32, i32
  }
}

</mosaic_0001>

<llo_original>
// kernel: lfe_forward.1
$region0: #{lfe_forward.1}
  #allocation0 [shape = 'u32[]', space=smem, size = 0x4, offset = 0x4, fixed_abs, tag = 'smem constant byte address 0x4 - core index']
  #allocation1 [shape = 'u32[72,128]{1,0:T(1,128)}', space=vmem, size = 0x9000, scoped, tag = 'internal scratch']
  %s0 = inlined_call_operand.vmem [shape: f32[2], index: 0, kind: input, shape index: {}]
  %s1 = inlined_call_operand.vmem [shape: bf16[256,512], index: 1, kind: input, shape index: {}]
  %s2 = inlined_call_operand.vmem [shape: bf16[512,128], index: 2, kind: input, shape index: {}]
  %s3 = inlined_call_operand.vmem [shape: f32[1,128], index: 3, kind: input, shape index: {}]
  %s4 = inlined_call_operand.vmem [shape: bf16[128,128], index: 4, kind: input, shape index: {}]
  %s5 = inlined_call_operand.vmem [shape: f32[1,128], index: 5, kind: input, shape index: {}]
  %s6 = inlined_call_operand.vmem [shape: f32[256,128], index: 6, kind: output, shape index: {}]
  %s7 = sld [smem:[#allocation0]]
  $region38: #{lfe_forward.1} parent=0
    _
  %s9 = ssub.s32 1, %s7
  %s10 = scalar_select 0, %s9, %s7
  $region1: #{lfe_forward.1} parent=0
    #allocation2 [shape = 'u8[512]{0}', space=smem, size = 0x200, scoped, tag = 'input window, operand 0, single buffered']
    #allocation3 [shape = 's32[1]{0}', space=sflag, size = 0x4, scoped, tag = 'scoped memory for lfe_forward.1']
    %11 = vsyncpa [#allocation3], 0
    // Predicated region
    $region2: #{lfe_forward.1} parent=1 // pred_check
      _
    $region3: #{lfe_forward.1} parent=1 // pred_check_branch
      %13 = sbr.rel (0) target = $region5
    $region4: #{lfe_forward.1} parent=1 // pred_region
      %15 = vsyncadd [#allocation3], 0
      %s17 = sshll.u32 %s0, 4
      %s18 = int_to_ptr.vmem [resolvable:$true] %s17
      %20 = dma.vmem_to_smem %s18, 16, [#allocation2], [#allocation3]
    $region5: #{lfe_forward.1} parent=1 // pred_fallthru
      _
    // Predicated region
    $region6: #{lfe_forward.1} parent=1 // pred_check
      _
    $region7: #{lfe_forward.1} parent=1 // pred_check_branch
      %22 = sbr.rel (0) target = $region9
    $region8: #{lfe_forward.1} parent=1 // pred_region
      _
    $region9: #{lfe_forward.1} parent=1 // pred_fallthru
      _
    // Predicated region
    $region10: #{lfe_forward.1} parent=1 // pred_check
      _
    $region11: #{lfe_forward.1} parent=1 // pred_check_branch
      %24 = sbr.rel (0) target = $region13
    $region12: #{lfe_forward.1} parent=1 // pred_region
      _
    $region13: #{lfe_forward.1} parent=1 // pred_fallthru
      _
    // Predicated region
    $region14: #{lfe_forward.1} parent=1 // pred_check
      _
    $region15: #{lfe_forward.1} parent=1 // pred_check_branch
      %26 = sbr.rel (0) target = $region17
    $region16: #{lfe_forward.1} parent=1 // pred_region
      _
    $region17: #{lfe_forward.1} parent=1 // pred_fallthru
      _
    // Predicated region
    $region18: #{lfe_forward.1} parent=1 // pred_check
      _
    $region19: #{lfe_forward.1} parent=1 // pred_check_branch
      %28 = sbr.rel (0) target = $region21
    $region20: #{lfe_forward.1} parent=1 // pred_region
      _
    $region21: #{lfe_forward.1} parent=1 // pred_fallthru
      _
    // Predicated region
    $region22: #{lfe_forward.1} parent=1 // pred_check
      _
    $region23: #{lfe_forward.1} parent=1 // pred_check_branch
      %30 = sbr.rel (0) target = $region25
    $region24: #{lfe_forward.1} parent=1 // pred_region
      _
    $region25: #{lfe_forward.1} parent=1 // pred_fallthru
      _
    // Predicated region
    $region26: #{lfe_forward.1} parent=1 // pred_check
      _
    $region27: #{lfe_forward.1} parent=1 // pred_check_branch
      %32 = sbr.rel (0) target = $region29
    $region28: #{lfe_forward.1} parent=1 // pred_region
      %34 = dma.done [#allocation3], 16
    $region29: #{lfe_forward.1} parent=1 // pred_fallthru
      _
    %35 = sfence
    %s36 = sld [smem:[#allocation2]]
    %s37 = sld [smem:[#allocation2 + $0x1]]
    %v38 = vld [vmem:[%s1] sm:$0xff]
    %v39 = vld [vmem:[%s1 + $0x8] sm:$0xff]
    %v40 = vld [vmem:[%s1 + $0x10] sm:$0xff]
    %v41 = vld [vmem:[%s1 + $0x18] sm:$0xff]
    %v42 = vld [vmem:[%s1 + $0x20] sm:$0xff]
    %v43 = vld [vmem:[%s1 + $0x28] sm:$0xff]
    %v44 = vld [vmem:[%s1 + $0x30] sm:$0xff]
    %v45 = vld [vmem:[%s1 + $0x38] sm:$0xff]
    %v46 = vld [vmem:[%s1 + $0x40] sm:$0xff]
    %v47 = vld [vmem:[%s1 + $0x48] sm:$0xff]
    %v48 = vld [vmem:[%s1 + $0x50] sm:$0xff]
    %v49 = vld [vmem:[%s1 + $0x58] sm:$0xff]
    %v50 = vld [vmem:[%s1 + $0x60] sm:$0xff]
    %v51 = vld [vmem:[%s1 + $0x68] sm:$0xff]
    %v52 = vld [vmem:[%s1 + $0x70] sm:$0xff]
    %v53 = vld [vmem:[%s1 + $0x78] sm:$0xff]
    %v54 = vld [vmem:[%s1 + $0x80] sm:$0xff]
    %v55 = vld [vmem:[%s1 + $0x88] sm:$0xff]
    %v56 = vld [vmem:[%s1 + $0x90] sm:$0xff]
    %v57 = vld [vmem:[%s1 + $0x98] sm:$0xff]
    %v58 = vld [vmem:[%s1 + $0xa0] sm:$0xff]
    %v59 = vld [vmem:[%s1 + $0xa8] sm:$0xff]
    %v60 = vld [vmem:[%s1 + $0xb0] sm:$0xff]
    %v61 = vld [vmem:[%s1 + $0xb8] sm:$0xff]
    %v62 = vld [vmem:[%s1 + $0xc0] sm:$0xff]
    %v63 = vld [vmem:[%s1 + $0xc8] sm:$0xff]
    %v64 = vld [vmem:[%s1 + $0xd0] sm:$0xff]
    %v65 = vld [vmem:[%s1 + $0xd8] sm:$0xff]
    %v66 = vld [vmem:[%s1 + $0xe0] sm:$0xff]
    %v67 = vld [vmem:[%s1 + $0xe8] sm:$0xff]
    %v68 = vld [vmem:[%s1 + $0xf0] sm:$0xff]
    %v69 = vld [vmem:[%s1 + $0xf8] sm:$0xff]
    %v70 = vld [vmem:[%s1 + $0x100] sm:$0xff]
    %v71 = vld [vmem:[%s1 + $0x108] sm:$0xff]
    %v72 = vld [vmem:[%s1 + $0x110] sm:$0xff]
    %v73 = vld [vmem:[%s1 + $0x118] sm:$0xff]
    %v74 = vld [vmem:[%s1 + $0x120] sm:$0xff]
    %v75 = vld [vmem:[%s1 + $0x128] sm:$0xff]
    %v76 = vld [vmem:[%s1 + $0x130] sm:$0xff]
    %v77 = vld [vmem:[%s1 + $0x138] sm:$0xff]
    %v78 = vld [vmem:[%s1 + $0x140] sm:$0xff]
    %v79 = vld [vmem:[%s1 + $0x148] sm:$0xff]
    %v80 = vld [vmem:[%s1 + $0x150] sm:$0xff]
    %v81 = vld [vmem:[%s1 + $0x158] sm:$0xff]
    %v82 = vld [vmem:[%s1 + $0x160] sm:$0xff]
    %v83 = vld [vmem:[%s1 + $0x168] sm:$0xff]
    %v84 = vld [vmem:[%s1 + $0x170] sm:$0xff]
    %v85 = vld [vmem:[%s1 + $0x178] sm:$0xff]
    %v86 = vld [vmem:[%s1 + $0x180] sm:$0xff]
    %v87 = vld [vmem:[%s1 + $0x188] sm:$0xff]
    %v88 = vld [vmem:[%s1 + $0x190] sm:$0xff]
    %v89 = vld [vmem:[%s1 + $0x198] sm:$0xff]
    %v90 = vld [vmem:[%s1 + $0x1a0] sm:$0xff]
    %v91 = vld [vmem:[%s1 + $0x1a8] sm:$0xff]
    %v92 = vld [vmem:[%s1 + $0x1b0] sm:$0xff]
    %v93 = vld [vmem:[%s1 + $0x1b8] sm:$0xff]
    %v94 = vld [vmem:[%s1 + $0x1c0] sm:$0xff]
    %v95 = vld [vmem:[%s1 + $0x1c8] sm:$0xff]
    %v96 = vld [vmem:[%s1 + $0x1d0] sm:$0xff]
    %v97 = vld [vmem:[%s1 + $0x1d8] sm:$0xff]
    %v98 = vld [vmem:[%s1 + $0x1e0] sm:$0xff]
    %v99 = vld [vmem:[%s1 + $0x1e8] sm:$0xff]
    %v100 = vld [vmem:[%s1 + $0x1f0] sm:$0xff]
    %v101 = vld [vmem:[%s1 + $0x1f8] sm:$0xff]
    %v102 = vld [vmem:[%s2] sm:$0xf]
    %v103 = vld [vmem:[%s2 + $0x4] sm:$0xf]
    %v104 = vld [vmem:[%s2 + $0x8] sm:$0xf]
    %v105 = vld [vmem:[%s2 + $0xc] sm:$0xf]
    %v106 = vld [vmem:[%s2 + $0x10] sm:$0xf]
    %v107 = vld [vmem:[%s2 + $0x14] sm:$0xf]
    %v108 = vld [vmem:[%s2 + $0x18] sm:$0xf]
    %v109 = vld [vmem:[%s2 + $0x1c] sm:$0xf]
    %v110 = vld [vmem:[%s2 + $0x20] sm:$0xf]
    %v111 = vld [vmem:[%s2 + $0x24] sm:$0xf]
    %v112 = vld [vmem:[%s2 + $0x28] sm:$0xf]
    %v113 = vld [vmem:[%s2 + $0x2c] sm:$0xf]
    %v114 = vld [vmem:[%s2 + $0x30] sm:$0xf]
    %v115 = vld [vmem:[%s2 + $0x34] sm:$0xf]
    %v116 = vld [vmem:[%s2 + $0x38] sm:$0xf]
    %v117 = vld [vmem:[%s2 + $0x3c] sm:$0xf]
    %v118 = vld [vmem:[%s2 + $0x40] sm:$0xf]
    %v119 = vld [vmem:[%s2 + $0x44] sm:$0xf]
    %v120 = vld [vmem:[%s2 + $0x48] sm:$0xf]
    %v121 = vld [vmem:[%s2 + $0x4c] sm:$0xf]
    %v122 = vld [vmem:[%s2 + $0x50] sm:$0xf]
    %v123 = vld [vmem:[%s2 + $0x54] sm:$0xf]
    %v124 = vld [vmem:[%s2 + $0x58] sm:$0xf]
    %v125 = vld [vmem:[%s2 + $0x5c] sm:$0xf]
    %v126 = vld [vmem:[%s2 + $0x60] sm:$0xf]
    %v127 = vld [vmem:[%s2 + $0x64] sm:$0xf]
    %v128 = vld [vmem:[%s2 + $0x68] sm:$0xf]
    %v129 = vld [vmem:[%s2 + $0x6c] sm:$0xf]
    %v130 = vld [vmem:[%s2 + $0x70] sm:$0xf]
    %v131 = vld [vmem:[%s2 + $0x74] sm:$0xf]
    %v132 = vld [vmem:[%s2 + $0x78] sm:$0xf]
    %v133 = vld [vmem:[%s2 + $0x7c] sm:$0xf]
    %v134 = vld [vmem:[%s2 + $0x80] sm:$0xf]
    %v135 = vld [vmem:[%s2 + $0x84] sm:$0xf]
    %v136 = vld [vmem:[%s2 + $0x88] sm:$0xf]
    %v137 = vld [vmem:[%s2 + $0x8c] sm:$0xf]
    %v138 = vld [vmem:[%s2 + $0x90] sm:$0xf]
    %v139 = vld [vmem:[%s2 + $0x94] sm:$0xf]
    %v140 = vld [vmem:[%s2 + $0x98] sm:$0xf]
    %v141 = vld [vmem:[%s2 + $0x9c] sm:$0xf]
    %v142 = vld [vmem:[%s2 + $0xa0] sm:$0xf]
    %v143 = vld [vmem:[%s2 + $0xa4] sm:$0xf]
    %v144 = vld [vmem:[%s2 + $0xa8] sm:$0xf]
    %v145 = vld [vmem:[%s2 + $0xac] sm:$0xf]
    %v146 = vld [vmem:[%s2 + $0xb0] sm:$0xf]
    %v147 = vld [vmem:[%s2 + $0xb4] sm:$0xf]
    %v148 = vld [vmem:[%s2 + $0xb8] sm:$0xf]
    %v149 = vld [vmem:[%s2 + $0xbc] sm:$0xf]
    %v150 = vld [vmem:[%s2 + $0xc0] sm:$0xf]
    %v151 = vld [vmem:[%s2 + $0xc4] sm:$0xf]
    %v152 = vld [vmem:[%s2 + $0xc8] sm:$0xf]
    %v153 = vld [vmem:[%s2 + $0xcc] sm:$0xf]
    %v154 = vld [vmem:[%s2 + $0xd0] sm:$0xf]
    %v155 = vld [vmem:[%s2 + $0xd4] sm:$0xf]
    %v156 = vld [vmem:[%s2 + $0xd8] sm:$0xf]
    %v157 = vld [vmem:[%s2 + $0xdc] sm:$0xf]
    %v158 = vld [vmem:[%s2 + $0xe0] sm:$0xf]
    %v159 = vld [vmem:[%s2 + $0xe4] sm:$0xf]
    %v160 = vld [vmem:[%s2 + $0xe8] sm:$0xf]
    %v161 = vld [vmem:[%s2 + $0xec] sm:$0xf]
    %v162 = vld [vmem:[%s2 + $0xf0] sm:$0xf]
    %v163 = vld [vmem:[%s2 + $0xf4] sm:$0xf]
    %v164 = vld [vmem:[%s2 + $0xf8] sm:$0xf]
    %v165 = vld [vmem:[%s2 + $0xfc] sm:$0xf]
    %v166 = vld [vmem:[%s3] sm:$0x1]
    %v168 = vperm.slane %v166, 0
    %v234 = vunpack.c.l.b16 %v38
    %v235 = vunpack.c.h.b16 %v38
    %v236 = vunpack.c.l.b16 %v39
    %v237 = vunpack.c.h.b16 %v39
    %v238 = vunpack.c.l.b16 %v40
    %v239 = vunpack.c.h.b16 %v40
    %v240 = vunpack.c.l.b16 %v41
    %v241 = vunpack.c.h.b16 %v41
    %v242 = vunpack.c.l.b16 %v42
    %v243 = vunpack.c.h.b16 %v42
    %v244 = vunpack.c.l.b16 %v43
    %v245 = vunpack.c.h.b16 %v43
    %v246 = vunpack.c.l.b16 %v44
    %v247 = vunpack.c.h.b16 %v44
    %v248 = vunpack.c.l.b16 %v45
    %v249 = vunpack.c.h.b16 %v45
    %v250 = vunpack.c.l.b16 %v46
    %v251 = vunpack.c.h.b16 %v46
    %v252 = vunpack.c.l.b16 %v47
    %v253 = vunpack.c.h.b16 %v47
    %v254 = vunpack.c.l.b16 %v48
    %v255 = vunpack.c.h.b16 %v48
    %v256 = vunpack.c.l.b16 %v49
    %v257 = vunpack.c.h.b16 %v49
    %v258 = vunpack.c.l.b16 %v50
    %v259 = vunpack.c.h.b16 %v50
    %v260 = vunpack.c.l.b16 %v51
    %v261 = vunpack.c.h.b16 %v51
    %v262 = vunpack.c.l.b16 %v52
    %v263 = vunpack.c.h.b16 %v52
    %v264 = vunpack.c.l.b16 %v53
    %v265 = vunpack.c.h.b16 %v53
    %v266 = vunpack.c.l.b16 %v54
    %v267 = vunpack.c.h.b16 %v54
    %v268 = vunpack.c.l.b16 %v55
    %v269 = vunpack.c.h.b16 %v55
    %v270 = vunpack.c.l.b16 %v56
    %v271 = vunpack.c.h.b16 %v56
    %v272 = vunpack.c.l.b16 %v57
    %v273 = vunpack.c.h.b16 %v57
    %v274 = vunpack.c.l.b16 %v58
    %v275 = vunpack.c.h.b16 %v58
    %v276 = vunpack.c.l.b16 %v59
    %v277 = vunpack.c.h.b16 %v59
    %v278 = vunpack.c.l.b16 %v60
    %v279 = vunpack.c.h.b16 %v60
    %v280 = vunpack.c.l.b16 %v61
    %v281 = vunpack.c.h.b16 %v61
    %v282 = vunpack.c.l.b16 %v62
    %v283 = vunpack.c.h.b16 %v62
    %v284 = vunpack.c.l.b16 %v63
    %v285 = vunpack.c.h.b16 %v63
    %v286 = vunpack.c.l.b16 %v64
    %v287 = vunpack.c.h.b16 %v64
    %v288 = vunpack.c.l.b16 %v65
    %v289 = vunpack.c.h.b16 %v65
    %v290 = vunpack.c.l.b16 %v66
    %v291 = vunpack.c.h.b16 %v66
    %v292 = vunpack.c.l.b16 %v67
    %v293 = vunpack.c.h.b16 %v67
    %v294 = vunpack.c.l.b16 %v68
    %v295 = vunpack.c.h.b16 %v68
    %v296 = vunpack.c.l.b16 %v69
    %v297 = vunpack.c.h.b16 %v69
    %v298 = vunpack.c.l.b16 %v70
    %v299 = vunpack.c.h.b16 %v70
    %v300 = vunpack.c.l.b16 %v71
    %v301 = vunpack.c.h.b16 %v71
    %v302 = vunpack.c.l.b16 %v72
    %v303 = vunpack.c.h.b16 %v72
    %v304 = vunpack.c.l.b16 %v73
    %v305 = vunpack.c.h.b16 %v73
    %v306 = vunpack.c.l.b16 %v74
    %v307 = vunpack.c.h.b16 %v74
    %v308 = vunpack.c.l.b16 %v75
    %v309 = vunpack.c.h.b16 %v75
    %v310 = vunpack.c.l.b16 %v76
    %v311 = vunpack.c.h.b16 %v76
    %v312 = vunpack.c.l.b16 %v77
    %v313 = vunpack.c.h.b16 %v77
    %v314 = vunpack.c.l.b16 %v78
    %v315 = vunpack.c.h.b16 %v78
    %v316 = vunpack.c.l.b16 %v79
    %v317 = vunpack.c.h.b16 %v79
    %v318 = vunpack.c.l.b16 %v80
    %v319 = vunpack.c.h.b16 %v80
    %v320 = vunpack.c.l.b16 %v81
    %v321 = vunpack.c.h.b16 %v81
    %v322 = vunpack.c.l.b16 %v82
    %v323 = vunpack.c.h.b16 %v82
    %v324 = vunpack.c.l.b16 %v83
    %v325 = vunpack.c.h.b16 %v83
    %v326 = vunpack.c.l.b16 %v84
    %v327 = vunpack.c.h.b16 %v84
    %v328 = vunpack.c.l.b16 %v85
    %v329 = vunpack.c.h.b16 %v85
    %v330 = vunpack.c.l.b16 %v86
    %v331 = vunpack.c.h.b16 %v86
    %v332 = vunpack.c.l.b16 %v87
    %v333 = vunpack.c.h.b16 %v87
    %v334 = vunpack.c.l.b16 %v88
    %v335 = vunpack.c.h.b16 %v88
    %v336 = vunpack.c.l.b16 %v89
    %v337 = vunpack.c.h.b16 %v89
    %v338 = vunpack.c.l.b16 %v90
    %v339 = vunpack.c.h.b16 %v90
    %v340 = vunpack.c.l.b16 %v91
    %v341 = vunpack.c.h.b16 %v91
    %v342 = vunpack.c.l.b16 %v92
    %v343 = vunpack.c.h.b16 %v92
    %v344 = vunpack.c.l.b16 %v93
    %v345 = vunpack.c.h.b16 %v93
    %v346 = vunpack.c.l.b16 %v94
    %v347 = vunpack.c.h.b16 %v94
    %v348 = vunpack.c.l.b16 %v95
    %v349 = vunpack.c.h.b16 %v95
    %v350 = vunpack.c.l.b16 %v96
    %v351 = vunpack.c.h.b16 %v96
    %v352 = vunpack.c.l.b16 %v97
    %v353 = vunpack.c.h.b16 %v97
    %v354 = vunpack.c.l.b16 %v98
    %v355 = vunpack.c.h.b16 %v98
    %v356 = vunpack.c.l.b16 %v99
    %v357 = vunpack.c.h.b16 %v99
    %v358 = vunpack.c.l.b16 %v100
    %v359 = vunpack.c.h.b16 %v100
    %v360 = vunpack.c.l.b16 %v101
    %v361 = vunpack.c.h.b16 %v101
    %v362 = vpack.c.b16 %v238, %v234
    %v363 = vpack.c.b16 %v239, %v235
    %v364 = vpack.c.b16 %v240, %v236
    %v365 = vpack.c.b16 %v241, %v237
    %v366 = vpack.c.b16 %v246, %v242
    %v367 = vpack.c.b16 %v247, %v243
    %v368 = vpack.c.b16 %v248, %v244
    %v369 = vpack.c.b16 %v249, %v245
    %v370 = vpack.c.b16 %v254, %v250
    %v371 = vpack.c.b16 %v255, %v251
    %v372 = vpack.c.b16 %v256, %v252
    %v373 = vpack.c.b16 %v257, %v253
    %v374 = vpack.c.b16 %v262, %v258
    %v375 = vpack.c.b16 %v263, %v259
    %v376 = vpack.c.b16 %v264, %v260
    %v377 = vpack.c.b16 %v265, %v261
    %v378 = vpack.c.b16 %v270, %v266
    %v379 = vpack.c.b16 %v271, %v267
    %v380 = vpack.c.b16 %v272, %v268
    %v381 = vpack.c.b16 %v273, %v269
    %v382 = vpack.c.b16 %v278, %v274
    %v383 = vpack.c.b16 %v279, %v275
    %v384 = vpack.c.b16 %v280, %v276
    %v385 = vpack.c.b16 %v281, %v277
    %v386 = vpack.c.b16 %v286, %v282
    %v387 = vpack.c.b16 %v287, %v283
    %v388 = vpack.c.b16 %v288, %v284
    %v389 = vpack.c.b16 %v289, %v285
    %v390 = vpack.c.b16 %v294, %v290
    %v391 = vpack.c.b16 %v295, %v291
    %v392 = vpack.c.b16 %v296, %v292
    %v393 = vpack.c.b16 %v297, %v293
    %v394 = vpack.c.b16 %v302, %v298
    %v395 = vpack.c.b16 %v303, %v299
    %v396 = vpack.c.b16 %v304, %v300
    %v397 = vpack.c.b16 %v305, %v301
    %v398 = vpack.c.b16 %v310, %v306
    %v399 = vpack.c.b16 %v311, %v307
    %v400 = vpack.c.b16 %v312, %v308
    %v401 = vpack.c.b16 %v313, %v309
    %v402 = vpack.c.b16 %v318, %v314
    %v403 = vpack.c.b16 %v319, %v315
    %v404 = vpack.c.b16 %v320, %v316
    %v405 = vpack.c.b16 %v321, %v317
    %v406 = vpack.c.b16 %v326, %v322
    %v407 = vpack.c.b16 %v327, %v323
    %v408 = vpack.c.b16 %v328, %v324
    %v409 = vpack.c.b16 %v329, %v325
    %v410 = vpack.c.b16 %v334, %v330
    %v411 = vpack.c.b16 %v335, %v331
    %v412 = vpack.c.b16 %v336, %v332
    %v413 = vpack.c.b16 %v337, %v333
    %v414 = vpack.c.b16 %v342, %v338
    %v415 = vpack.c.b16 %v343, %v339
    %v416 = vpack.c.b16 %v344, %v340
    %v417 = vpack.c.b16 %v345, %v341
    %v418 = vpack.c.b16 %v350, %v346
    %v419 = vpack.c.b16 %v351, %v347
    %v420 = vpack.c.b16 %v352, %v348
    %v421 = vpack.c.b16 %v353, %v349
    %v422 = vpack.c.b16 %v358, %v354
    %v423 = vpack.c.b16 %v359, %v355
    %v424 = vpack.c.b16 %v360, %v356
    %v425 = vpack.c.b16 %v361, %v357
    %v554 = vunpack.c.l.b16 %v102
    %v555 = vunpack.c.l.b16 %v103
    %v556 = vunpack.c.l.b16 %v104
    %v557 = vunpack.c.l.b16 %v105
    %v558 = vunpack.c.l.b16 %v106
    %v559 = vunpack.c.l.b16 %v107
    %v560 = vunpack.c.l.b16 %v108
    %v561 = vunpack.c.l.b16 %v109
    %v562 = vunpack.c.l.b16 %v110
    %v563 = vunpack.c.l.b16 %v111
    %v564 = vunpack.c.l.b16 %v112
    %v565 = vunpack.c.l.b16 %v113
    %v566 = vunpack.c.l.b16 %v114
    %v567 = vunpack.c.l.b16 %v115
    %v568 = vunpack.c.l.b16 %v116
    %v569 = vunpack.c.l.b16 %v117
    %v570 = vunpack.c.l.b16 %v118
    %v571 = vunpack.c.l.b16 %v119
    %v572 = vunpack.c.l.b16 %v120
    %v573 = vunpack.c.l.b16 %v121
    %v574 = vunpack.c.l.b16 %v122
    %v575 = vunpack.c.l.b16 %v123
    %v576 = vunpack.c.l.b16 %v124
    %v577 = vunpack.c.l.b16 %v125
    %v578 = vunpack.c.l.b16 %v126
    %v579 = vunpack.c.l.b16 %v127
    %v580 = vunpack.c.l.b16 %v128
    %v581 = vunpack.c.l.b16 %v129
    %v582 = vunpack.c.l.b16 %v130
    %v583 = vunpack.c.l.b16 %v131
    %v584 = vunpack.c.l.b16 %v132
    %v585 = vunpack.c.l.b16 %v133
    %v586 = vunpack.c.l.b16 %v134
    %v587 = vunpack.c.l.b16 %v135
    %v588 = vunpack.c.l.b16 %v136
    %v589 = vunpack.c.l.b16 %v137
    %v590 = vunpack.c.l.b16 %v138
    %v591 = vunpack.c.l.b16 %v139
    %v592 = vunpack.c.l.b16 %v140
    %v593 = vunpack.c.l.b16 %v141
    %v594 = vunpack.c.l.b16 %v142
    %v595 = vunpack.c.l.b16 %v143
    %v596 = vunpack.c.l.b16 %v144
    %v597 = vunpack.c.l.b16 %v145
    %v598 = vunpack.c.l.b16 %v146
    %v599 = vunpack.c.l.b16 %v147
    %v600 = vunpack.c.l.b16 %v148
    %v601 = vunpack.c.l.b16 %v149
    %v602 = vunpack.c.l.b16 %v150
    %v603 = vunpack.c.l.b16 %v151
    %v604 = vunpack.c.l.b16 %v152
    %v605 = vunpack.c.l.b16 %v153
    %v606 = vunpack.c.l.b16 %v154
    %v607 = vunpack.c.l.b16 %v155
    %v608 = vunpack.c.l.b16 %v156
    %v609 = vunpack.c.l.b16 %v157
    %v610 = vunpack.c.l.b16 %v158
    %v611 = vunpack.c.l.b16 %v159
    %v612 = vunpack.c.l.b16 %v160
    %v613 = vunpack.c.l.b16 %v161
    %v614 = vunpack.c.l.b16 %v162
    %v615 = vunpack.c.l.b16 %v163
    %v616 = vunpack.c.l.b16 %v164
    %v617 = vunpack.c.l.b16 %v165
    %v618 = vpack.c.b16 %v555, %v554
    %v619 = vpack.c.b16 %v557, %v556
    %v620 = vpack.c.b16 %v559, %v558
    %v621 = vpack.c.b16 %v561, %v560
    %v622 = vpack.c.b16 %v563, %v562
    %v623 = vpack.c.b16 %v565, %v564
    %v624 = vpack.c.b16 %v567, %v566
    %v625 = vpack.c.b16 %v569, %v568
    %v626 = vpack.c.b16 %v571, %v570
    %v627 = vpack.c.b16 %v573, %v572
    %v628 = vpack.c.b16 %v575, %v574
    %v629 = vpack.c.b16 %v577, %v576
    %v630 = vpack.c.b16 %v579, %v578
    %v631 = vpack.c.b16 %v581, %v580
    %v632 = vpack.c.b16 %v583, %v582
    %v633 = vpack.c.b16 %v585, %v584
    %v634 = vpack.c.b16 %v587, %v586
    %v635 = vpack.c.b16 %v589, %v588
    %v636 = vpack.c.b16 %v591, %v590
    %v637 = vpack.c.b16 %v593, %v592
    %v638 = vpack.c.b16 %v595, %v594
    %v639 = vpack.c.b16 %v597, %v596
    %v640 = vpack.c.b16 %v599, %v598
    %v641 = vpack.c.b16 %v601, %v600
    %v642 = vpack.c.b16 %v603, %v602
    %v643 = vpack.c.b16 %v605, %v604
    %v644 = vpack.c.b16 %v607, %v606
    %v645 = vpack.c.b16 %v609, %v608
    %v646 = vpack.c.b16 %v611, %v610
    %v647 = vpack.c.b16 %v613, %v612
    %v648 = vpack.c.b16 %v615, %v614
    %v649 = vpack.c.b16 %v617, %v616
    %682 = vmatpush.bf16.msra.mxu0 %v625
    %683 = vmatpush.bf16.msra.mxu0 %v624
    %684 = vmatpush.bf16.msra.mxu0 %v623
    %685 = vmatpush.bf16.msra.mxu0 %v622
    %686 = vmatpush.bf16.msra.mxu0 %v621
    %687 = vmatpush.bf16.msra.mxu0 %v620
    %688 = vmatpush.bf16.msra.mxu0 %v619
    %689 = vmatpush.bf16.msra.mxu0 %v618
    %690 = vmatmul.bf16.gmra.mxu0 %v362
    %v691 = vpop.f32.mrf.mxu0
    %v692 = vadd.f32 %v168, %v691
    %v693 = vpop.f32.mrf.mxu0
    %v694 = vadd.f32 %v168, %v693
    %695 = vmatmul.bf16.gmra.mxu0 %v366
    %v696 = vpop.f32.mrf.mxu0
    %v697 = vadd.f32 %v168, %v696
    %v698 = vpop.f32.mrf.mxu0
    %v699 = vadd.f32 %v168, %v698
    %700 = vmatmul.bf16.gmra.mxu0 %v370
    %v701 = vpop.f32.mrf.mxu0
    %v702 = vadd.f32 %v168, %v701
    %v703 = vpop.f32.mrf.mxu0
    %v704 = vadd.f32 %v168, %v703
    %705 = vmatmul.bf16.gmra.mxu0 %v374
    %v706 = vpop.f32.mrf.mxu0
    %v707 = vadd.f32 %v168, %v706
    %v708 = vpop.f32.mrf.mxu0
    %v709 = vadd.f32 %v168, %v708
    %710 = vmatmul.bf16.gmra.mxu0 %v378
    %v711 = vpop.f32.mrf.mxu0
    %v712 = vadd.f32 %v168, %v711
    %v713 = vpop.f32.mrf.mxu0
    %v714 = vadd.f32 %v168, %v713
    %715 = vmatmul.bf16.gmra.mxu0 %v382
    %v716 = vpop.f32.mrf.mxu0
    %v717 = vadd.f32 %v168, %v716
    %v718 = vpop.f32.mrf.mxu0
    %v719 = vadd.f32 %v168, %v718
    %720 = vmatmul.bf16.gmra.mxu0 %v386
    %v721 = vpop.f32.mrf.mxu0
    %v722 = vadd.f32 %v168, %v721
    %v723 = vpop.f32.mrf.mxu0
    %v724 = vadd.f32 %v168, %v723
    %725 = vmatmul.bf16.gmra.mxu0 %v390
    %v726 = vpop.f32.mrf.mxu0
    %v727 = vadd.f32 %v168, %v726
    %v728 = vpop.f32.mrf.mxu0
    %v729 = vadd.f32 %v168, %v728
    %730 = vmatmul.bf16.gmra.mxu0 %v394
    %v731 = vpop.f32.mrf.mxu0
    %v732 = vadd.f32 %v168, %v731
    %v733 = vpop.f32.mrf.mxu0
    %v734 = vadd.f32 %v168, %v733
    %735 = vmatmul.bf16.gmra.mxu0 %v398
    %v736 = vpop.f32.mrf.mxu0
    %v737 = vadd.f32 %v168, %v736
    %v738 = vpop.f32.mrf.mxu0
    %v739 = vadd.f32 %v168, %v738
    %740 = vmatmul.bf16.gmra.mxu0 %v402
    %v741 = vpop.f32.mrf.mxu0
    %v742 = vadd.f32 %v168, %v741
    %v743 = vpop.f32.mrf.mxu0
    %v744 = vadd.f32 %v168, %v743
    %745 = vmatmul.bf16.gmra.mxu0 %v406
    %v746 = vpop.f32.mrf.mxu0
    %v747 = vadd.f32 %v168, %v746
    %v748 = vpop.f32.mrf.mxu0
    %v749 = vadd.f32 %v168, %v748
    %750 = vmatmul.bf16.gmra.mxu0 %v410
    %v751 = vpop.f32.mrf.mxu0
    %v752 = vadd.f32 %v168, %v751
    %v753 = vpop.f32.mrf.mxu0
    %v754 = vadd.f32 %v168, %v753
    %755 = vmatmul.bf16.gmra.mxu0 %v414
    %v756 = vpop.f32.mrf.mxu0
    %v757 = vadd.f32 %v168, %v756
    %v758 = vpop.f32.mrf.mxu0
    %v759 = vadd.f32 %v168, %v758
    %760 = vmatmul.bf16.gmra.mxu0 %v418
    %v761 = vpop.f32.mrf.mxu0
    %v762 = vadd.f32 %v168, %v761
    %v763 = vpop.f32.mrf.mxu0
    %v764 = vadd.f32 %v168, %v763
    %765 = vmatmul.bf16.gmra.mxu0 %v422
    %v766 = vpop.f32.mrf.mxu0
    %v767 = vadd.f32 %v168, %v766
    %v768 = vpop.f32.mrf.mxu0
    %v769 = vadd.f32 %v168, %v768
    %770 = vdwg.mxu0
    %771 = vmatpush.bf16.msra.mxu0 %v633
    %772 = vmatpush.bf16.msra.mxu0 %v632
    %773 = vmatpush.bf16.msra.mxu0 %v631
    %774 = vmatpush.bf16.msra.mxu0 %v630
    %775 = vmatpush.bf16.msra.mxu0 %v629
    %776 = vmatpush.bf16.msra.mxu0 %v628
    %777 = vmatpush.bf16.msra.mxu0 %v627
    %778 = vmatpush.bf16.msra.mxu0 %v626
    %779 = vmatmul.bf16.gmra.mxu0 %v363
    %v780 = vpop.f32.mrf.mxu0
    %v781 = vadd.f32 %v692, %v780
    %v782 = vpop.f32.mrf.mxu0
    %v783 = vadd.f32 %v694, %v782
    %784 = vmatmul.bf16.gmra.mxu0 %v367
    %v785 = vpop.f32.mrf.mxu0
    %v786 = vadd.f32 %v697, %v785
    %v787 = vpop.f32.mrf.mxu0
    %v788 = vadd.f32 %v699, %v787
    %789 = vmatmul.bf16.gmra.mxu0 %v371
    %v790 = vpop.f32.mrf.mxu0
    %v791 = vadd.f32 %v702, %v790
    %v792 = vpop.f32.mrf.mxu0
    %v793 = vadd.f32 %v704, %v792
    %794 = vmatmul.bf16.gmra.mxu0 %v375
    %v795 = vpop.f32.mrf.mxu0
    %v796 = vadd.f32 %v707, %v795
    %v797 = vpop.f32.mrf.mxu0
    %v798 = vadd.f32 %v709, %v797
    %799 = vmatmul.bf16.gmra.mxu0 %v379
    %v800 = vpop.f32.mrf.mxu0
    %v801 = vadd.f32 %v712, %v800
    %v802 = vpop.f32.mrf.mxu0
    %v803 = vadd.f32 %v714, %v802
    %804 = vmatmul.bf16.gmra.mxu0 %v383
    %v805 = vpop.f32.mrf.mxu0
    %v806 = vadd.f32 %v717, %v805
    %v807 = vpop.f32.mrf.mxu0
    %v808 = vadd.f32 %v719, %v807
    %809 = vmatmul.bf16.gmra.mxu0 %v387
    %v810 = vpop.f32.mrf.mxu0
    %v811 = vadd.f32 %v722, %v810
    %v812 = vpop.f32.mrf.mxu0
    %v813 = vadd.f32 %v724, %v812
    %814 = vmatmul.bf16.gmra.mxu0 %v391
    %v815 = vpop.f32.mrf.mxu0
    %v816 = vadd.f32 %v727, %v815
    %v817 = vpop.f32.mrf.mxu0
    %v818 = vadd.f32 %v729, %v817
    %819 = vmatmul.bf16.gmra.mxu0 %v395
    %v820 = vpop.f32.mrf.mxu0
    %v821 = vadd.f32 %v732, %v820
    %v822 = vpop.f32.mrf.mxu0
    %v823 = vadd.f32 %v734, %v822
    %824 = vmatmul.bf16.gmra.mxu0 %v399
    %v825 = vpop.f32.mrf.mxu0
    %v826 = vadd.f32 %v737, %v825
    %v827 = vpop.f32.mrf.mxu0
    %v828 = vadd.f32 %v739, %v827
    %829 = vmatmul.bf16.gmra.mxu0 %v403
    %v830 = vpop.f32.mrf.mxu0
    %v831 = vadd.f32 %v742, %v830
    %v832 = vpop.f32.mrf.mxu0
    %v833 = vadd.f32 %v744, %v832
    %834 = vmatmul.bf16.gmra.mxu0 %v407
    %v835 = vpop.f32.mrf.mxu0
    %v836 = vadd.f32 %v747, %v835
    %v837 = vpop.f32.mrf.mxu0
    %v838 = vadd.f32 %v749, %v837
    %839 = vmatmul.bf16.gmra.mxu0 %v411
    %v840 = vpop.f32.mrf.mxu0
    %v841 = vadd.f32 %v752, %v840
    %v842 = vpop.f32.mrf.mxu0
    %v843 = vadd.f32 %v754, %v842
    %844 = vmatmul.bf16.gmra.mxu0 %v415
    %v845 = vpop.f32.mrf.mxu0
    %v846 = vadd.f32 %v757, %v845
    %v847 = vpop.f32.mrf.mxu0
    %v848 = vadd.f32 %v759, %v847
    %849 = vmatmul.bf16.gmra.mxu0 %v419
    %v850 = vpop.f32.mrf.mxu0
    %v851 = vadd.f32 %v762, %v850
    %v852 = vpop.f32.mrf.mxu0
    %v853 = vadd.f32 %v764, %v852
    %854 = vmatmul.bf16.gmra.mxu0 %v423
    %v855 = vpop.f32.mrf.mxu0
    %v856 = vadd.f32 %v767, %v855
    %v857 = vpop.f32.mrf.mxu0
    %v858 = vadd.f32 %v769, %v857
    %859 = vdwg.mxu0
    %860 = vmatpush.bf16.msra.mxu0 %v641
    %861 = vmatpush.bf16.msra.mxu0 %v640
    %862 = vmatpush.bf16.msra.mxu0 %v639
    %863 = vmatpush.bf16.msra.mxu0 %v638
    %864 = vmatpush.bf16.msra.mxu0 %v637
    %865 = vmatpush.bf16.msra.mxu0 %v636
    %866 = vmatpush.bf16.msra.mxu0 %v635
    %867 = vmatpush.bf16.msra.mxu0 %v634
    %868 = vmatmul.bf16.gmra.mxu0 %v364
    %v869 = vpop.f32.mrf.mxu0
    %v870 = vadd.f32 %v781, %v869
    %v871 = vpop.f32.mrf.mxu0
    %v872 = vadd.f32 %v783, %v871
    %873 = vmatmul.bf16.gmra.mxu0 %v368
    %v874 = vpop.f32.mrf.mxu0
    %v875 = vadd.f32 %v786, %v874
    %v876 = vpop.f32.mrf.mxu0
    %v877 = vadd.f32 %v788, %v876
    %878 = vmatmul.bf16.gmra.mxu0 %v372
    %v879 = vpop.f32.mrf.mxu0
    %v880 = vadd.f32 %v791, %v879
    %v881 = vpop.f32.mrf.mxu0
    %v882 = vadd.f32 %v793, %v881
    %883 = vmatmul.bf16.gmra.mxu0 %v376
    %v884 = vpop.f32.mrf.mxu0
    %v885 = vadd.f32 %v796, %v884
    %v886 = vpop.f32.mrf.mxu0
    %v887 = vadd.f32 %v798, %v886
    %888 = vmatmul.bf16.gmra.mxu0 %v380
    %v889 = vpop.f32.mrf.mxu0
    %v890 = vadd.f32 %v801, %v889
    %v891 = vpop.f32.mrf.mxu0
    %v892 = vadd.f32 %v803, %v891
    %893 = vmatmul.bf16.gmra.mxu0 %v384
    %v894 = vpop.f32.mrf.mxu0
    %v895 = vadd.f32 %v806, %v894
    %v896 = vpop.f32.mrf.mxu0
    %v897 = vadd.f32 %v808, %v896
    %898 = vmatmul.bf16.gmra.mxu0 %v388
    %v899 = vpop.f32.mrf.mxu0
    %v900 = vadd.f32 %v811, %v899
    %v901 = vpop.f32.mrf.mxu0
    %v902 = vadd.f32 %v813, %v901
    %903 = vmatmul.bf16.gmra.mxu0 %v392
    %v904 = vpop.f32.mrf.mxu0
    %v905 = vadd.f32 %v816, %v904
    %v906 = vpop.f32.mrf.mxu0
    %v907 = vadd.f32 %v818, %v906
    %908 = vmatmul.bf16.gmra.mxu0 %v396
    %v909 = vpop.f32.mrf.mxu0
    %v910 = vadd.f32 %v821, %v909
    %v911 = vpop.f32.mrf.mxu0
    %v912 = vadd.f32 %v823, %v911
    %913 = vmatmul.bf16.gmra.mxu0 %v400
    %v914 = vpop.f32.mrf.mxu0
    %v915 = vadd.f32 %v826, %v914
    %v916 = vpop.f32.mrf.mxu0
    %v917 = vadd.f32 %v828, %v916
    %918 = vmatmul.bf16.gmra.mxu0 %v404
    %v919 = vpop.f32.mrf.mxu0
    %v920 = vadd.f32 %v831, %v919
    %v921 = vpop.f32.mrf.mxu0
    %v922 = vadd.f32 %v833, %v921
    %923 = vmatmul.bf16.gmra.mxu0 %v408
    %v924 = vpop.f32.mrf.mxu0
    %v925 = vadd.f32 %v836, %v924
    %v926 = vpop.f32.mrf.mxu0
    %v927 = vadd.f32 %v838, %v926
    %928 = vmatmul.bf16.gmra.mxu0 %v412
    %v929 = vpop.f32.mrf.mxu0
    %v930 = vadd.f32 %v841, %v929
    %v931 = vpop.f32.mrf.mxu0
    %v932 = vadd.f32 %v843, %v931
    %933 = vmatmul.bf16.gmra.mxu0 %v416
    %v934 = vpop.f32.mrf.mxu0
    %v935 = vadd.f32 %v846, %v934
    %v936 = vpop.f32.mrf.mxu0
    %v937 = vadd.f32 %v848, %v936
    %938 = vmatmul.bf16.gmra.mxu0 %v420
    %v939 = vpop.f32.mrf.mxu0
    %v940 = vadd.f32 %v851, %v939
    %v941 = vpop.f32.mrf.mxu0
    %v942 = vadd.f32 %v853, %v941
    %943 = vmatmul.bf16.gmra.mxu0 %v424
    %v944 = vpop.f32.mrf.mxu0
    %v945 = vadd.f32 %v856, %v944
    %v946 = vpop.f32.mrf.mxu0
    %v947 = vadd.f32 %v858, %v946
    %948 = vdwg.mxu0
    %949 = vmatpush.bf16.msra.mxu0 %v649
    %950 = vmatpush.bf16.msra.mxu0 %v648
    %951 = vmatpush.bf16.msra.mxu0 %v647
    %952 = vmatpush.bf16.msra.mxu0 %v646
    %953 = vmatpush.bf16.msra.mxu0 %v645
    %954 = vmatpush.bf16.msra.mxu0 %v644
    %955 = vmatpush.bf16.msra.mxu0 %v643
    %956 = vmatpush.bf16.msra.mxu0 %v642
    %957 = vmatmul.bf16.gmra.mxu0 %v365
    %v958 = vpop.f32.mrf.mxu0
    %v959 = vadd.f32 %v870, %v958
    %v960 = vpop.f32.mrf.mxu0
    %v961 = vadd.f32 %v872, %v960
    %962 = vmatmul.bf16.gmra.mxu0 %v369
    %v963 = vpop.f32.mrf.mxu0
    %v964 = vadd.f32 %v875, %v963
    %v965 = vpop.f32.mrf.mxu0
    %v966 = vadd.f32 %v877, %v965
    %967 = vmatmul.bf16.gmra.mxu0 %v373
    %v968 = vpop.f32.mrf.mxu0
    %v969 = vadd.f32 %v880, %v968
    %v970 = vpop.f32.mrf.mxu0
    %v971 = vadd.f32 %v882, %v970
    %972 = vmatmul.bf16.gmra.mxu0 %v377
    %v973 = vpop.f32.mrf.mxu0
    %v974 = vadd.f32 %v885, %v973
    %v975 = vpop.f32.mrf.mxu0
    %v976 = vadd.f32 %v887, %v975
    %977 = vmatmul.bf16.gmra.mxu0 %v381
    %v978 = vpop.f32.mrf.mxu0
    %v979 = vadd.f32 %v890, %v978
    %v980 = vpop.f32.mrf.mxu0
    %v981 = vadd.f32 %v892, %v980
    %982 = vmatmul.bf16.gmra.mxu0 %v385
    %v983 = vpop.f32.mrf.mxu0
    %v984 = vadd.f32 %v895, %v983
    %v985 = vpop.f32.mrf.mxu0
    %v986 = vadd.f32 %v897, %v985
    %987 = vmatmul.bf16.gmra.mxu0 %v389
    %v988 = vpop.f32.mrf.mxu0
    %v989 = vadd.f32 %v900, %v988
    %v990 = vpop.f32.mrf.mxu0
    %v991 = vadd.f32 %v902, %v990
    %992 = vmatmul.bf16.gmra.mxu0 %v393
    %v993 = vpop.f32.mrf.mxu0
    %v994 = vadd.f32 %v905, %v993
    %v995 = vpop.f32.mrf.mxu0
    %v996 = vadd.f32 %v907, %v995
    %997 = vmatmul.bf16.gmra.mxu0 %v397
    %v998 = vpop.f32.mrf.mxu0
    %v999 = vadd.f32 %v910, %v998
    %v1000 = vpop.f32.mrf.mxu0
    %v1001 = vadd.f32 %v912, %v1000
    %1002 = vmatmul.bf16.gmra.mxu0 %v401
    %v1003 = vpop.f32.mrf.mxu0
    %v1004 = vadd.f32 %v915, %v1003
    %v1005 = vpop.f32.mrf.mxu0
    %v1006 = vadd.f32 %v917, %v1005
    %1007 = vmatmul.bf16.gmra.mxu0 %v405
    %v1008 = vpop.f32.mrf.mxu0
    %v1009 = vadd.f32 %v920, %v1008
    %v1010 = vpop.f32.mrf.mxu0
    %v1011 = vadd.f32 %v922, %v1010
    %1012 = vmatmul.bf16.gmra.mxu0 %v409
    %v1013 = vpop.f32.mrf.mxu0
    %v1014 = vadd.f32 %v925, %v1013
    %v1015 = vpop.f32.mrf.mxu0
    %v1016 = vadd.f32 %v927, %v1015
    %1017 = vmatmul.bf16.gmra.mxu0 %v413
    %v1018 = vpop.f32.mrf.mxu0
    %v1019 = vadd.f32 %v930, %v1018
    %v1020 = vpop.f32.mrf.mxu0
    %v1021 = vadd.f32 %v932, %v1020
    %1022 = vmatmul.bf16.gmra.mxu0 %v417
    %v1023 = vpop.f32.mrf.mxu0
    %v1024 = vadd.f32 %v935, %v1023
    %v1025 = vpop.f32.mrf.mxu0
    %v1026 = vadd.f32 %v937, %v1025
    %1027 = vmatmul.bf16.gmra.mxu0 %v421
    %v1028 = vpop.f32.mrf.mxu0
    %v1029 = vadd.f32 %v940, %v1028
    %v1030 = vpop.f32.mrf.mxu0
    %v1031 = vadd.f32 %v942, %v1030
    %1032 = vmatmul.bf16.gmra.mxu0 %v425
    %v1033 = vpop.f32.mrf.mxu0
    %v1034 = vadd.f32 %v945, %v1033
    %v1035 = vpop.f32.mrf.mxu0
    %v1036 = vadd.f32 %v947, %v1035
    %1037 = vdwg.mxu0
    %vm1038 = vcmp.ge.f32.partialorder %v959, 0.0
    %vm1039 = vcmp.ge.f32.partialorder %v961, 0.0
    %vm1040 = vcmp.ge.f32.partialorder %v964, 0.0
    %vm1041 = vcmp.ge.f32.partialorder %v966, 0.0
    %vm1042 = vcmp.ge.f32.partialorder %v969, 0.0
    %vm1043 = vcmp.ge.f32.partialorder %v971, 0.0
    %vm1044 = vcmp.ge.f32.partialorder %v974, 0.0
    %vm1045 = vcmp.ge.f32.partialorder %v976, 0.0
    %vm1046 = vcmp.ge.f32.partialorder %v979, 0.0
    %vm1047 = vcmp.ge.f32.partialorder %v981, 0.0
    %vm1048 = vcmp.ge.f32.partialorder %v984, 0.0
    %vm1049 = vcmp.ge.f32.partialorder %v986, 0.0
    %vm1050 = vcmp.ge.f32.partialorder %v989, 0.0
    %vm1051 = vcmp.ge.f32.partialorder %v991, 0.0
    %vm1052 = vcmp.ge.f32.partialorder %v994, 0.0
    %vm1053 = vcmp.ge.f32.partialorder %v996, 0.0
    %vm1054 = vcmp.ge.f32.partialorder %v999, 0.0
    %vm1055 = vcmp.ge.f32.partialorder %v1001, 0.0
    %vm1056 = vcmp.ge.f32.partialorder %v1004, 0.0
    %vm1057 = vcmp.ge.f32.partialorder %v1006, 0.0
    %vm1058 = vcmp.ge.f32.partialorder %v1009, 0.0
    %vm1059 = vcmp.ge.f32.partialorder %v1011, 0.0
    %vm1060 = vcmp.ge.f32.partialorder %v1014, 0.0
    %vm1061 = vcmp.ge.f32.partialorder %v1016, 0.0
    %vm1062 = vcmp.ge.f32.partialorder %v1019, 0.0
    %vm1063 = vcmp.ge.f32.partialorder %v1021, 0.0
    %vm1064 = vcmp.ge.f32.partialorder %v1024, 0.0
    %vm1065 = vcmp.ge.f32.partialorder %v1026, 0.0
    %vm1066 = vcmp.ge.f32.partialorder %v1029, 0.0
    %vm1067 = vcmp.ge.f32.partialorder %v1031, 0.0
    %vm1068 = vcmp.ge.f32.partialorder %v1034, 0.0
    %vm1069 = vcmp.ge.f32.partialorder %v1036, 0.0
    %v1070 = vstv %s36
    %v1071 = vmul.f32 %v1070, %v959
    %v1072 = vmul.f32 %v1070, %v961
    %v1073 = vmul.f32 %v1070, %v964
    %v1074 = vmul.f32 %v1070, %v966
    %v1075 = vmul.f32 %v1070, %v969
    %v1076 = vmul.f32 %v1070, %v971
    %v1077 = vmul.f32 %v1070, %v974
    %v1078 = vmul.f32 %v1070, %v976
    %v1079 = vmul.f32 %v1070, %v979
    %v1080 = vmul.f32 %v1070, %v981
    %v1081 = vmul.f32 %v1070, %v984
    %v1082 = vmul.f32 %v1070, %v986
    %v1083 = vmul.f32 %v1070, %v989
    %v1084 = vmul.f32 %v1070, %v991
    %v1085 = vmul.f32 %v1070, %v994
    %v1086 = vmul.f32 %v1070, %v996
    %v1087 = vmul.f32 %v1070, %v999
    %v1088 = vmul.f32 %v1070, %v1001
    %v1089 = vmul.f32 %v1070, %v1004
    %v1090 = vmul.f32 %v1070, %v1006
    %v1091 = vmul.f32 %v1070, %v1009
    %v1092 = vmul.f32 %v1070, %v1011
    %v1093 = vmul.f32 %v1070, %v1014
    %v1094 = vmul.f32 %v1070, %v1016
    %v1095 = vmul.f32 %v1070, %v1019
    %v1096 = vmul.f32 %v1070, %v1021
    %v1097 = vmul.f32 %v1070, %v1024
    %v1098 = vmul.f32 %v1070, %v1026
    %v1099 = vmul.f32 %v1070, %v1029
    %v1100 = vmul.f32 %v1070, %v1031
    %v1101 = vmul.f32 %v1070, %v1034
    %v1102 = vmul.f32 %v1070, %v1036
    %v1103 = vsel %vm1038, %v959, %v1071
    %v1104 = vsel %vm1039, %v961, %v1072
    %v1105 = vsel %vm1040, %v964, %v1073
    %v1106 = vsel %vm1041, %v966, %v1074
    %v1107 = vsel %vm1042, %v969, %v1075
    %v1108 = vsel %vm1043, %v971, %v1076
    %v1109 = vsel %vm1044, %v974, %v1077
    %v1110 = vsel %vm1045, %v976, %v1078
    %v1111 = vsel %vm1046, %v979, %v1079
    %v1112 = vsel %vm1047, %v981, %v1080
    %v1113 = vsel %vm1048, %v984, %v1081
    %v1114 = vsel %vm1049, %v986, %v1082
    %v1115 = vsel %vm1050, %v989, %v1083
    %v1116 = vsel %vm1051, %v991, %v1084
    %v1117 = vsel %vm1052, %v994, %v1085
    %v1118 = vsel %vm1053, %v996, %v1086
    %v1119 = vsel %vm1054, %v999, %v1087
    %v1120 = vsel %vm1055, %v1001, %v1088
    %v1121 = vsel %vm1056, %v1004, %v1089
    %v1122 = vsel %vm1057, %v1006, %v1090
    %v1123 = vsel %vm1058, %v1009, %v1091
    %v1124 = vsel %vm1059, %v1011, %v1092
    %v1125 = vsel %vm1060, %v1014, %v1093
    %v1126 = vsel %vm1061, %v1016, %v1094
    %v1127 = vsel %vm1062, %v1019, %v1095
    %v1128 = vsel %vm1063, %v1021, %v1096
    %v1129 = vsel %vm1064, %v1024, %v1097
    %v1130 = vsel %vm1065, %v1026, %v1098
    %v1131 = vsel %vm1066, %v1029, %v1099
    %v1132 = vsel %vm1067, %v1031, %v1100
    %v1133 = vsel %vm1068, %v1034, %v1101
    %v1134 = vsel %vm1069, %v1036, %v1102
    %v1135 = vpack.c.bf16 %v1104, %v1103
    %v1136 = vpack.c.bf16 %v1106, %v1105
    %v1137 = vpack.c.bf16 %v1108, %v1107
    %v1138 = vpack.c.bf16 %v1110, %v1109
    %v1139 = vpack.c.bf16 %v1112, %v1111
    %v1140 = vpack.c.bf16 %v1114, %v1113
    %v1141 = vpack.c.bf16 %v1116, %v1115
    %v1142 = vpack.c.bf16 %v1118, %v1117
    %v1143 = vpack.c.bf16 %v1120, %v1119
    %v1144 = vpack.c.bf16 %v1122, %v1121
    %v1145 = vpack.c.bf16 %v1124, %v1123
    %v1146 = vpack.c.bf16 %v1126, %v1125
    %v1147 = vpack.c.bf16 %v1128, %v1127
    %v1148 = vpack.c.bf16 %v1130, %v1129
    %v1149 = vpack.c.bf16 %v1132, %v1131
    %v1150 = vpack.c.bf16 %v1134, %v1133
    %v1151 = vld [vmem:[%s4] sm:$0xf]
    %v1152 = vld [vmem:[%s4 + $0x4] sm:$0xf]
    %v1153 = vld [vmem:[%s4 + $0x8] sm:$0xf]
    %v1154 = vld [vmem:[%s4 + $0xc] sm:$0xf]
    %v1155 = vld [vmem:[%s4 + $0x10] sm:$0xf]
    %v1156 = vld [vmem:[%s4 + $0x14] sm:$0xf]
    %v1157 = vld [vmem:[%s4 + $0x18] sm:$0xf]
    %v1158 = vld [vmem:[%s4 + $0x1c] sm:$0xf]
    %v1159 = vld [vmem:[%s4 + $0x20] sm:$0xf]
    %v1160 = vld [vmem:[%s4 + $0x24] sm:$0xf]
    %v1161 = vld [vmem:[%s4 + $0x28] sm:$0xf]
    %v1162 = vld [vmem:[%s4 + $0x2c] sm:$0xf]
    %v1163 = vld [vmem:[%s4 + $0x30] sm:$0xf]
    %v1164 = vld [vmem:[%s4 + $0x34] sm:$0xf]
    %v1165 = vld [vmem:[%s4 + $0x38] sm:$0xf]
    %v1166 = vld [vmem:[%s4 + $0x3c] sm:$0xf]
    %v1167 = vld [vmem:[%s5] sm:$0x1]
    %v1169 = vperm.slane %v1167, 0
    %v1187 = vunpack.c.l.b16 %v1151
    %v1188 = vunpack.c.l.b16 %v1152
    %v1189 = vunpack.c.l.b16 %v1153
    %v1190 = vunpack.c.l.b16 %v1154
    %v1191 = vunpack.c.l.b16 %v1155
    %v1192 = vunpack.c.l.b16 %v1156
    %v1193 = vunpack.c.l.b16 %v1157
    %v1194 = vunpack.c.l.b16 %v1158
    %v1195 = vunpack.c.l.b16 %v1159
    %v1196 = vunpack.c.l.b16 %v1160
    %v1197 = vunpack.c.l.b16 %v1161
    %v1198 = vunpack.c.l.b16 %v1162
    %v1199 = vunpack.c.l.b16 %v1163
    %v1200 = vunpack.c.l.b16 %v1164
    %v1201 = vunpack.c.l.b16 %v1165
    %v1202 = vunpack.c.l.b16 %v1166
    %v1203 = vpack.c.b16 %v1188, %v1187
    %v1204 = vpack.c.b16 %v1190, %v1189
    %v1205 = vpack.c.b16 %v1192, %v1191
    %v1206 = vpack.c.b16 %v1194, %v1193
    %v1207 = vpack.c.b16 %v1196, %v1195
    %v1208 = vpack.c.b16 %v1198, %v1197
    %v1209 = vpack.c.b16 %v1200, %v1199
    %v1210 = vpack.c.b16 %v1202, %v1201
    %1219 = vmatpush.bf16.msra.mxu0 %v1210
    %1220 = vmatpush.bf16.msra.mxu0 %v1209
    %1221 = vmatpush.bf16.msra.mxu0 %v1208
    %1222 = vmatpush.bf16.msra.mxu0 %v1207
    %1223 = vmatpush.bf16.msra.mxu0 %v1206
    %1224 = vmatpush.bf16.msra.mxu0 %v1205
    %1225 = vmatpush.bf16.msra.mxu0 %v1204
    %1226 = vmatpush.bf16.msra.mxu0 %v1203
    %1227 = vmatmul.bf16.gmra.mxu0 %v1135
    %v1228 = vpop.f32.mrf.mxu0
    %v1229 = vadd.f32 %v1169, %v1228
    %v1230 = vpop.f32.mrf.mxu0
    %v1231 = vadd.f32 %v1169, %v1230
    %1232 = vmatmul.bf16.gmra.mxu0 %v1136
    %v1233 = vpop.f32.mrf.mxu0
    %v1234 = vadd.f32 %v1169, %v1233
    %v1235 = vpop.f32.mrf.mxu0
    %v1236 = vadd.f32 %v1169, %v1235
    %1237 = vmatmul.bf16.gmra.mxu0 %v1137
    %v1238 = vpop.f32.mrf.mxu0
    %v1239 = vadd.f32 %v1169, %v1238
    %v1240 = vpop.f32.mrf.mxu0
    %v1241 = vadd.f32 %v1169, %v1240
    %1242 = vmatmul.bf16.gmra.mxu0 %v1138
    %v1243 = vpop.f32.mrf.mxu0
    %v1244 = vadd.f32 %v1169, %v1243
    %v1245 = vpop.f32.mrf.mxu0
    %v1246 = vadd.f32 %v1169, %v1245
    %1247 = vmatmul.bf16.gmra.mxu0 %v1139
    %v1248 = vpop.f32.mrf.mxu0
    %v1249 = vadd.f32 %v1169, %v1248
    %v1250 = vpop.f32.mrf.mxu0
    %v1251 = vadd.f32 %v1169, %v1250
    %1252 = vmatmul.bf16.gmra.mxu0 %v1140
    %v1253 = vpop.f32.mrf.mxu0
    %v1254 = vadd.f32 %v1169, %v1253
    %v1255 = vpop.f32.mrf.mxu0
    %v1256 = vadd.f32 %v1169, %v1255
    %1257 = vmatmul.bf16.gmra.mxu0 %v1141
    %v1258 = vpop.f32.mrf.mxu0
    %v1259 = vadd.f32 %v1169, %v1258
    %v1260 = vpop.f32.mrf.mxu0
    %v1261 = vadd.f32 %v1169, %v1260
    %1262 = vmatmul.bf16.gmra.mxu0 %v1142
    %v1263 = vpop.f32.mrf.mxu0
    %v1264 = vadd.f32 %v1169, %v1263
    %v1265 = vpop.f32.mrf.mxu0
    %v1266 = vadd.f32 %v1169, %v1265
    %1267 = vmatmul.bf16.gmra.mxu0 %v1143
    %v1268 = vpop.f32.mrf.mxu0
    %v1269 = vadd.f32 %v1169, %v1268
    %v1270 = vpop.f32.mrf.mxu0
    %v1271 = vadd.f32 %v1169, %v1270
    %1272 = vmatmul.bf16.gmra.mxu0 %v1144
    %v1273 = vpop.f32.mrf.mxu0
    %v1274 = vadd.f32 %v1169, %v1273
    %v1275 = vpop.f32.mrf.mxu0
    %v1276 = vadd.f32 %v1169, %v1275
    %1277 = vmatmul.bf16.gmra.mxu0 %v1145
    %v1278 = vpop.f32.mrf.mxu0
    %v1279 = vadd.f32 %v1169, %v1278
    %v1280 = vpop.f32.mrf.mxu0
    %v1281 = vadd.f32 %v1169, %v1280
    %1282 = vmatmul.bf16.gmra.mxu0 %v1146
    %v1283 = vpop.f32.mrf.mxu0
    %v1284 = vadd.f32 %v1169, %v1283
    %v1285 = vpop.f32.mrf.mxu0
    %v1286 = vadd.f32 %v1169, %v1285
    %1287 = vmatmul.bf16.gmra.mxu0 %v1147
    %v1288 = vpop.f32.mrf.mxu0
    %v1289 = vadd.f32 %v1169, %v1288
    %v1290 = vpop.f32.mrf.mxu0
    %v1291 = vadd.f32 %v1169, %v1290
    %1292 = vmatmul.bf16.gmra.mxu0 %v1148
    %v1293 = vpop.f32.mrf.mxu0
    %v1294 = vadd.f32 %v1169, %v1293
    %v1295 = vpop.f32.mrf.mxu0
    %v1296 = vadd.f32 %v1169, %v1295
    %1297 = vmatmul.bf16.gmra.mxu0 %v1149
    %v1298 = vpop.f32.mrf.mxu0
    %v1299 = vadd.f32 %v1169, %v1298
    %v1300 = vpop.f32.mrf.mxu0
    %v1301 = vadd.f32 %v1169, %v1300
    %1302 = vmatmul.bf16.gmra.mxu0 %v1150
    %v1303 = vpop.f32.mrf.mxu0
    %v1304 = vadd.f32 %v1169, %v1303
    %v1305 = vpop.f32.mrf.mxu0
    %v1306 = vadd.f32 %v1169, %v1305
    %1307 = vdwg.mxu0
    %vm1308 = vcmp.ge.f32.partialorder %v1229, 0.0
    %vm1309 = vcmp.ge.f32.partialorder %v1231, 0.0
    %vm1310 = vcmp.ge.f32.partialorder %v1234, 0.0
    %vm1311 = vcmp.ge.f32.partialorder %v1236, 0.0
    %vm1312 = vcmp.ge.f32.partialorder %v1239, 0.0
    %vm1313 = vcmp.ge.f32.partialorder %v1241, 0.0
    %vm1314 = vcmp.ge.f32.partialorder %v1244, 0.0
    %vm1315 = vcmp.ge.f32.partialorder %v1246, 0.0
    %vm1316 = vcmp.ge.f32.partialorder %v1249, 0.0
    %vm1317 = vcmp.ge.f32.partialorder %v1251, 0.0
    %vm1318 = vcmp.ge.f32.partialorder %v1254, 0.0
    %vm1319 = vcmp.ge.f32.partialorder %v1256, 0.0
    %vm1320 = vcmp.ge.f32.partialorder %v1259, 0.0
    %vm1321 = vcmp.ge.f32.partialorder %v1261, 0.0
    %vm1322 = vcmp.ge.f32.partialorder %v1264, 0.0
    %vm1323 = vcmp.ge.f32.partialorder %v1266, 0.0
    %vm1324 = vcmp.ge.f32.partialorder %v1269, 0.0
    %vm1325 = vcmp.ge.f32.partialorder %v1271, 0.0
    %vm1326 = vcmp.ge.f32.partialorder %v1274, 0.0
    %vm1327 = vcmp.ge.f32.partialorder %v1276, 0.0
    %vm1328 = vcmp.ge.f32.partialorder %v1279, 0.0
    %vm1329 = vcmp.ge.f32.partialorder %v1281, 0.0
    %vm1330 = vcmp.ge.f32.partialorder %v1284, 0.0
    %vm1331 = vcmp.ge.f32.partialorder %v1286, 0.0
    %vm1332 = vcmp.ge.f32.partialorder %v1289, 0.0
    %vm1333 = vcmp.ge.f32.partialorder %v1291, 0.0
    %vm1334 = vcmp.ge.f32.partialorder %v1294, 0.0
    %vm1335 = vcmp.ge.f32.partialorder %v1296, 0.0
    %vm1336 = vcmp.ge.f32.partialorder %v1299, 0.0
    %vm1337 = vcmp.ge.f32.partialorder %v1301, 0.0
    %vm1338 = vcmp.ge.f32.partialorder %v1304, 0.0
    %vm1339 = vcmp.ge.f32.partialorder %v1306, 0.0
    %v1340 = vstv %s37
    %v1341 = vmul.f32 %v1340, %v1229
    %v1342 = vmul.f32 %v1340, %v1231
    %v1343 = vmul.f32 %v1340, %v1234
    %v1344 = vmul.f32 %v1340, %v1236
    %v1345 = vmul.f32 %v1340, %v1239
    %v1346 = vmul.f32 %v1340, %v1241
    %v1347 = vmul.f32 %v1340, %v1244
    %v1348 = vmul.f32 %v1340, %v1246
    %v1349 = vmul.f32 %v1340, %v1249
    %v1350 = vmul.f32 %v1340, %v1251
    %v1351 = vmul.f32 %v1340, %v1254
    %v1352 = vmul.f32 %v1340, %v1256
    %v1353 = vmul.f32 %v1340, %v1259
    %v1354 = vmul.f32 %v1340, %v1261
    %v1355 = vmul.f32 %v1340, %v1264
    %v1356 = vmul.f32 %v1340, %v1266
    %v1357 = vmul.f32 %v1340, %v1269
    %v1358 = vmul.f32 %v1340, %v1271
    %v1359 = vmul.f32 %v1340, %v1274
    %v1360 = vmul.f32 %v1340, %v1276
    %v1361 = vmul.f32 %v1340, %v1279
    %v1362 = vmul.f32 %v1340, %v1281
    %v1363 = vmul.f32 %v1340, %v1284
    %v1364 = vmul.f32 %v1340, %v1286
    %v1365 = vmul.f32 %v1340, %v1289
    %v1366 = vmul.f32 %v1340, %v1291
    %v1367 = vmul.f32 %v1340, %v1294
    %v1368 = vmul.f32 %v1340, %v1296
    %v1369 = vmul.f32 %v1340, %v1299
    %v1370 = vmul.f32 %v1340, %v1301
    %v1371 = vmul.f32 %v1340, %v1304
    %v1372 = vmul.f32 %v1340, %v1306
    %v1373 = vsel %vm1308, %v1229, %v1341
    %v1374 = vsel %vm1309, %v1231, %v1342
    %v1375 = vsel %vm1310, %v1234, %v1343
    %v1376 = vsel %vm1311, %v1236, %v1344
    %v1377 = vsel %vm1312, %v1239, %v1345
    %v1378 = vsel %vm1313, %v1241, %v1346
    %v1379 = vsel %vm1314, %v1244, %v1347
    %v1380 = vsel %vm1315, %v1246, %v1348
    %v1381 = vsel %vm1316, %v1249, %v1349
    %v1382 = vsel %vm1317, %v1251, %v1350
    %v1383 = vsel %vm1318, %v1254, %v1351
    %v1384 = vsel %vm1319, %v1256, %v1352
    %v1385 = vsel %vm1320, %v1259, %v1353
    %v1386 = vsel %vm1321, %v1261, %v1354
    %v1387 = vsel %vm1322, %v1264, %v1355
    %v1388 = vsel %vm1323, %v1266, %v1356
    %v1389 = vsel %vm1324, %v1269, %v1357
    %v1390 = vsel %vm1325, %v1271, %v1358
    %v1391 = vsel %vm1326, %v1274, %v1359
    %v1392 = vsel %vm1327, %v1276, %v1360
    %v1393 = vsel %vm1328, %v1279, %v1361
    %v1394 = vsel %vm1329, %v1281, %v1362
    %v1395 = vsel %vm1330, %v1284, %v1363
    %v1396 = vsel %vm1331, %v1286, %v1364
    %v1397 = vsel %vm1332, %v1289, %v1365
    %v1398 = vsel %vm1333, %v1291, %v1366
    %v1399 = vsel %vm1334, %v1294, %v1367
    %v1400 = vsel %vm1335, %v1296, %v1368
    %v1401 = vsel %vm1336, %v1299, %v1369
    %v1402 = vsel %vm1337, %v1301, %v1370
    %v1403 = vsel %vm1338, %v1304, %v1371
    %v1404 = vsel %vm1339, %v1306, %v1372
    %1405 = vst [vmem:[%s6] sm:$0xff] %v1373
    %1406 = vst [vmem:[%s6 + $0x8] sm:$0xff] %v1374
    %1407 = vst [vmem:[%s6 + $0x10] sm:$0xff] %v1375
    %1408 = vst [vmem:[%s6 + $0x18] sm:$0xff] %v1376
    %1409 = vst [vmem:[%s6 + $0x20] sm:$0xff] %v1377
    %1410 = vst [vmem:[%s6 + $0x28] sm:$0xff] %v1378
    %1411 = vst [vmem:[%s6 + $0x30] sm:$0xff] %v1379
    %1412 = vst [vmem:[%s6 + $0x38] sm:$0xff] %v1380
    %1413 = vst [vmem:[%s6 + $0x40] sm:$0xff] %v1381
    %1414 = vst [vmem:[%s6 + $0x48] sm:$0xff] %v1382
    %1415 = vst [vmem:[%s6 + $0x50] sm:$0xff] %v1383
    %1416 = vst [vmem:[%s6 + $0x58] sm:$0xff] %v1384
    %1417 = vst [vmem:[%s6 + $0x60] sm:$0xff] %v1385
    %1418 = vst [vmem:[%s6 + $0x68] sm:$0xff] %v1386
    %1419 = vst [vmem:[%s6 + $0x70] sm:$0xff] %v1387
    %1420 = vst [vmem:[%s6 + $0x78] sm:$0xff] %v1388
    %1421 = vst [vmem:[%s6 + $0x80] sm:$0xff] %v1389
    %1422 = vst [vmem:[%s6 + $0x88] sm:$0xff] %v1390
    %1423 = vst [vmem:[%s6 + $0x90] sm:$0xff] %v1391
    %1424 = vst [vmem:[%s6 + $0x98] sm:$0xff] %v1392
    %1425 = vst [vmem:[%s6 + $0xa0] sm:$0xff] %v1393
    %1426 = vst [vmem:[%s6 + $0xa8] sm:$0xff] %v1394
    %1427 = vst [vmem:[%s6 + $0xb0] sm:$0xff] %v1395
    %1428 = vst [vmem:[%s6 + $0xb8] sm:$0xff] %v1396
    %1429 = vst [vmem:[%s6 + $0xc0] sm:$0xff] %v1397
    %1430 = vst [vmem:[%s6 + $0xc8] sm:$0xff] %v1398
    %1431 = vst [vmem:[%s6 + $0xd0] sm:$0xff] %v1399
    %1432 = vst [vmem:[%s6 + $0xd8] sm:$0xff] %v1400
    %1433 = vst [vmem:[%s6 + $0xe0] sm:$0xff] %v1401
    %1434 = vst [vmem:[%s6 + $0xe8] sm:$0xff] %v1402
    %1435 = vst [vmem:[%s6 + $0xf0] sm:$0xff] %v1403
    %1436 = vst [vmem:[%s6 + $0xf8] sm:$0xff] %v1404
    // Predicated region
    $region30: #{lfe_forward.1} parent=1 // pred_check
      _
    $region31: #{lfe_forward.1} parent=1 // pred_check_branch
      %1438 = sbr.rel (0) target = $region33
    $region32: #{lfe_forward.1} parent=1 // pred_region
      _
    $region33: #{lfe_forward.1} parent=1 // pred_fallthru
      _
    // Predicated region
    $region34: #{lfe_forward.1} parent=1 // pred_check
      _
    $region35: #{lfe_forward.1} parent=1 // pred_check_branch
      %1440 = sbr.rel (0) target = $region37
    $region36: #{lfe_forward.1} parent=1 // pred_region
      _
    $region37: #{lfe_forward.1} parent=1 // pred_fallthru
      _
    %1441 = vsyncpa [#allocation3], 1

</llo_original>
